<compile_context>
chip_gen: v7x
topology: tpu7x:2x2x1
jax: 0.10.0
libtpu: 0.0.40
codegen_flags: <defaults>
</compile_context>

<pallas_src>
import functools

import jax
import jax.numpy as jnp
from jax.experimental import pallas as pl
from jax.experimental.pallas import tpu as pltpu


def _masked_bce_partial_kernel(logits_ref, labels_ref, out_ref, *, rows):
    """Per-block partial sums of masked BCE.

    Writes an (8, 2*lanes) slab: [:, :lanes] = loss partial, [:, lanes:] =
    valid-count partial. Masked / out-of-bounds positions are excluded via
    select (not multiply) so log of garbage can never poison the sums.
    """
    tm, lanes = logits_ref.shape
    p = logits_ref[...].astype(jnp.float32)   # native dtype read, per-vreg upcast
    y = labels_ref[...].astype(jnp.float32)

    # Global row index: masks garbage rows of a partial last block (`rows` is
    # the true row count, static at trace time -> no scalar prefetch needed).
    row0 = pl.program_id(0) * tm
    gid = row0 + jax.lax.broadcasted_iota(jnp.int32, (tm, lanes), 0)
    valid = (y != -1.0) & (gid < rows)

    # Hard-label BCE: one log/element (half the EUP work of the 2-log form).
    q = jnp.where(y == 1.0, p, 1.0 - p)
    loss = jnp.where(valid, -jnp.log(q), 0.0)
    cnt = valid.astype(jnp.float32)

    # Fold the row tile down to one (8, lanes) vreg-shaped partial: pure VPU
    # adds along the leading axis, no serial scalar accumulation.
    out_ref[:, :lanes] = jnp.sum(loss.reshape(tm // 8, 8, lanes), axis=0)
    out_ref[:, lanes:] = jnp.sum(cnt.reshape(tm // 8, 8, lanes), axis=0)


def custom_cross_entropy_loss(logits, labels, *, block_elems=1 << 19):
    """Pallas equivalent of CustomCrossEntropyLoss.forward (returns a scalar).

    logits: probabilities in (0, 1); labels: {0, 1} with -1 marking padding.
    Precondition (same as the torch module): at least one unmasked element,
    otherwise the result is 0/0 (NaN).
    """
    flat_p = jnp.asarray(logits).reshape(-1)
    flat_y = jnp.asarray(labels).reshape(-1)
    assert flat_p.size == flat_y.size
    total = flat_p.size

    # Lane width: largest of 512/256/128 dividing the element count keeps the
    # flat->2D reshape a free bitcast (zero extra HBM traffic). Only ragged
    # sizes pay a pad pass; padded events carry label -1 so they are masked.
    lanes = next((c for c in (512, 256, 128) if total % c == 0), None)
    if lanes is None:
        lanes = 128
        pad = (-total) % lanes
        flat_p = jnp.pad(flat_p, (0, pad), constant_values=0.5)   # any prob in (0,1)
        flat_y = jnp.pad(flat_y, (0, pad), constant_values=-1)    # pad event -> masked
        total += pad

    rows = total // lanes
    p2d = flat_p.reshape(rows, lanes)
    y2d = flat_y.reshape(rows, lanes)

    if rows < 8:
        # Tiny inputs (< 8*lanes elements): pad up to one full sublane tile so
        # the (8, lanes)-aligned block never exceeds the array (negligible copy).
        p2d = jnp.pad(p2d, ((0, 8 - rows), (0, 0)), constant_values=0.5)
        y2d = jnp.pad(y2d, ((0, 8 - rows), (0, 0)), constant_values=-1)
        rows = 8

    # Row tile: bounded by block_elems (keeps double-buffered inputs well under
    # v7x's 64 MiB VMEM) and capped so the parallel grid axis has >= 4 blocks
    # when possible (uses both v7x TensorCores; neutral on single-TC v5e/v6e).
    tm_cap = max(8, (block_elems // lanes) // 8 * 8)
    tm_par = 8 * pl.cdiv(rows, 8 * 4)
    tm = max(8, min(tm_cap, tm_par))
    grid = pl.cdiv(rows, tm)

    kernel = functools.partial(_masked_bce_partial_kernel, rows=rows)

    parts = pl.pallas_call(
        kernel,
        out_shape=jax.ShapeDtypeStruct((grid * 8, 2 * lanes), jnp.float32),
        grid_spec=pltpu.PrefetchScalarGridSpec(
            num_scalar_prefetch=0,
            grid=(grid,),
            in_specs=[
                pl.BlockSpec((tm, lanes), lambda i: (i, 0)),
                pl.BlockSpec((tm, lanes), lambda i: (i, 0)),
            ],
            out_specs=pl.BlockSpec((8, 2 * lanes), lambda i: (i, 0)),
        ),
        compiler_params=pltpu.CompilerParams(
            # No cross-iteration carry -> shardable across TensorCores (v7x).
            dimension_semantics=("parallel",),
            # Live use is ~8-9 MiB (2 MiB/input, double-buffered); explicit
            # limit documents the v7x (64 MiB) constraint and keeps headroom
            # over v5e's 16 MiB scoped default.
            vmem_limit_bytes=32 << 20,
        ),
    )(p2d, y2d)

    loss_sum = jnp.sum(parts[:, :lanes])
    # Count partials are exact small integers; sum them in int32 so the count
    # stays exact beyond 2^24 valid elements.
    cnt_sum = jnp.sum(parts[:, lanes:].astype(jnp.int32)).astype(jnp.float32)
    # Matches torch semantics: all-masked input yields 0/0 (caller precondition).
    return loss_sum / cnt_sum


def _reference(logits, labels):
    logits = jnp.asarray(logits, jnp.float32)
    labels = jnp.asarray(labels, jnp.float32)
    mask = (labels != -1.0).astype(jnp.float32)
    losses = -(labels * jnp.log(logits) + (1.0 - labels) * jnp.log(1.0 - logits))
    return jnp.sum(losses * mask) / jnp.sum(mask)


def _make_inputs(key, shape):
    k1, k2, k3 = jax.random.split(key, 3)
    logits = jax.random.uniform(k1, shape, jnp.float32, minval=0.05, maxval=0.95)
    labels = jax.random.bernoulli(k2, 0.5, shape).astype(jnp.float32)
    pad = jax.random.bernoulli(k3, 0.2, shape)
    labels = jnp.where(pad, jnp.float32(-1.0), labels)
    return logits, labels


if __name__ == "__main__":
    key = jax.random.PRNGKey(0)
    ka, kb, kc, kd = jax.random.split(key, 4)

    # Case 1: 4-D input (2, 4, 16, 16) -> 2048 elems, lane-divisible, tiny rows.
    logits, labels = _make_inputs(ka, (2, 4, 16, 16))
    loss = jax.block_until_ready(custom_cross_entropy_loss(logits, labels))
    ref = _reference(logits, labels)
    assert jnp.allclose(loss, ref, rtol=1e-5, atol=1e-6), (loss, ref)

    # Case 2: batch of event probabilities (16, 256) -> exact (8, 512) view.
    logits2, labels2 = _make_inputs(kb, (16, 256))
    loss2 = jax.block_until_ready(custom_cross_entropy_loss(logits2, labels2))
    ref2 = _reference(logits2, labels2)
    assert jnp.allclose(loss2, ref2, rtol=1e-5, atol=1e-6), (loss2, ref2)

    # Case 3: ragged size (3, 5, 300) -> lane pad path + partial last block
    # (exercises the in-kernel row-bound mask).
    logits3, labels3 = _make_inputs(kc, (3, 5, 300))
    loss3 = jax.block_until_ready(custom_cross_entropy_loss(logits3, labels3))
    ref3 = _reference(logits3, labels3)
    assert jnp.allclose(loss3, ref3, rtol=1e-5, atol=1e-6), (loss3, ref3)

    # Case 4: force a multi-block parallel grid with a small block budget.
    logits4, labels4 = _make_inputs(kd, (64, 512))
    loss4 = jax.block_until_ready(
        custom_cross_entropy_loss(logits4, labels4, block_elems=4096)
    )
    ref4 = _reference(logits4, labels4)
    assert jnp.allclose(loss4, ref4, rtol=1e-5, atol=1e-6), (loss4, ref4)

    print("KERNEL_OK")
</pallas_src>

<mosaic_0001>
module attributes {stable_mosaic.version = 11 : i64} {
  func.func @_masked_bce_partial_kernel(%arg0: i32, %arg1: memref<8x512xf32, #tpu.memory_space<vmem>>, %arg2: memref<8x512xf32, #tpu.memory_space<vmem>>, %arg3: memref<8x1024xf32, #tpu.memory_space<vmem>>) attributes {dimension_semantics = [#tpu.dimension_semantics<parallel>], iteration_bounds = array<i64: 1>, scalar_prefetch = 0 : i64, scratch_operands = 0 : i64, tpu.core_type = #tpu.core_type<tc>, window_params = [{transform_indices = @transform_0, window_bounds = array<i64: 8, 512>}, {transform_indices = @transform_1, window_bounds = array<i64: 8, 512>}, {transform_indices = @transform_2, window_bounds = array<i64: 8, 1024>}]} {
    %c0 = arith.constant 0 : index
    %c0_0 = arith.constant 0 : index
    %0 = vector.load %arg1[%c0, %c0_0] : memref<8x512xf32, #tpu.memory_space<vmem>>, vector<8x512xf32>
    %c0_1 = arith.constant 0 : index
    %c0_2 = arith.constant 0 : index
    %1 = vector.load %arg2[%c0_1, %c0_2] : memref<8x512xf32, #tpu.memory_space<vmem>>, vector<8x512xf32>
    %c8_i32 = arith.constant 8 : i32
    %2 = arith.muli %arg0, %c8_i32 : i32
    %3 = tpu.iota {dimensions = array<i32: 0>} : vector<8x512xi32>
    %4 = vector.broadcast %2 : i32 to vector<8x512xi32>
    %5 = arith.addi %4, %3 : vector<8x512xi32>
    %cst = arith.constant -1.000000e+00 : f32
    %6 = vector.broadcast %cst : f32 to vector<8x512xf32>
    %7 = arith.cmpf one, %1, %6 : vector<8x512xf32>
    %c8_i32_3 = arith.constant 8 : i32
    %8 = vector.broadcast %c8_i32_3 : i32 to vector<8x512xi32>
    %9 = arith.cmpi slt, %5, %8 : vector<8x512xi32>
    %10 = arith.andi %7, %9 : vector<8x512xi1>
    %cst_4 = arith.constant 1.000000e+00 : f32
    %11 = vector.broadcast %cst_4 : f32 to vector<8x512xf32>
    %12 = arith.cmpf oeq, %1, %11 : vector<8x512xf32>
    %cst_5 = arith.constant 1.000000e+00 : f32
    %13 = vector.broadcast %cst_5 : f32 to vector<8x512xf32>
    %14 = arith.subf %13, %0 : vector<8x512xf32>
    %15 = arith.select %12, %0, %14 : vector<8x512xi1>, vector<8x512xf32>
    %16 = math.log %15 : vector<8x512xf32>
    %cst_6 = arith.constant 0.000000e+00 : f32
    %17 = vector.broadcast %cst_6 : f32 to vector<8x512xf32>
    %18 = arith.subf %17, %16 : vector<8x512xf32>
    %cst_7 = arith.constant 0.000000e+00 : f32
    %19 = vector.broadcast %cst_7 : f32 to vector<8x512xf32>
    %20 = arith.select %10, %18, %19 : vector<8x512xi1>, vector<8x512xf32>
    %21 = arith.extui %10 : vector<8x512xi1> to vector<8x512xi32>
    %22 = arith.sitofp %21 : vector<8x512xi32> to vector<8x512xf32>
    %23 = vector.shape_cast %20 : vector<8x512xf32> to vector<1x8x512xf32>
    %cst_8 = arith.constant dense<0.000000e+00> : vector<8x512xf32>
    %24 = vector.multi_reduction <add>, %23, %cst_8 [0] : vector<1x8x512xf32> to vector<8x512xf32>
    %c0_9 = arith.constant 0 : index
    %c0_10 = arith.constant 0 : index
    %25 = vector.load %arg3[%c0_9, %c0_10] : memref<8x1024xf32, #tpu.memory_space<vmem>>, vector<8x512xf32>
    tpu.vector_store %arg3[%c0_9, %c0_10], %24 {strides = array<i32>} : memref<8x1024xf32, #tpu.memory_space<vmem>>, vector<8x512xf32>,
    %26 = vector.shape_cast %22 : vector<8x512xf32> to vector<1x8x512xf32>
    %cst_11 = arith.constant dense<0.000000e+00> : vector<8x512xf32>
    %27 = vector.multi_reduction <add>, %26, %cst_11 [0] : vector<1x8x512xf32> to vector<8x512xf32>
    %c0_12 = arith.constant 0 : index
    %c512 = arith.constant 512 : index
    %28 = vector.load %arg3[%c0_12, %c512] : memref<8x1024xf32, #tpu.memory_space<vmem>>, vector<8x512xf32>
    tpu.vector_store %arg3[%c0_12, %c512], %27 {strides = array<i32>} : memref<8x1024xf32, #tpu.memory_space<vmem>>, vector<8x512xf32>,
    return
  }
  func.func @transform_0(%arg0: i32) -> (i32, i32) {
    %c0_i32 = arith.constant 0 : i32
    %c0_i32_0 = arith.constant 0 : i32
    return %arg0, %c0_i32 : i32, i32
  }
  func.func @transform_1(%arg0: i32) -> (i32, i32) {
    %c0_i32 = arith.constant 0 : i32
    %c0_i32_0 = arith.constant 0 : i32
    return %arg0, %c0_i32 : i32, i32
  }
  func.func @transform_2(%arg0: i32) -> (i32, i32) {
    %c0_i32 = arith.constant 0 : i32
    %c0_i32_0 = arith.constant 0 : i32
    return %arg0, %c0_i32 : i32, i32
  }
}

</mosaic_0001>

<llo_original>
// kernel: tpu_custom_call.1
$region0: #{tpu_custom_call.1}
  #allocation0 [shape = 'u32[]', space=smem, size = 0x4, offset = 0x4, fixed_abs, tag = 'smem constant byte address 0x4 - core index']
  #allocation1 [shape = 'u32[144,128]{1,0:T(1,128)}', space=vmem, size = 0x12000, scoped, tag = 'internal scratch']
  %s0 = inlined_call_operand.hbm [shape: f32[8,512], index: 0, kind: input, shape index: {}]
  %s1 = inlined_call_operand.hbm [shape: f32[8,512], index: 1, kind: input, shape index: {}]
  %s2 = inlined_call_operand.hbm [shape: f32[8,1024], index: 2, kind: output, shape index: {}]
  %s3 = sld [smem:[#allocation0]]
  $region26: #{tpu_custom_call.1} parent=0
    _
  %s5 = ssub.s32 1, %s3
  %s6 = scalar_select 0, %s5, %s3
  $region1: #{tpu_custom_call.1} parent=0
    #allocation2 [shape = 'u8[16384]{0}', space=vmem, size = 0x4000, scoped, tag = 'input window, operand 0, single buffered']
    #allocation3 [shape = 's32[1]{0}', space=sflag, size = 0x4, scoped, tag = 'scoped memory for tpu_custom_call.1']
    #allocation4 [shape = 's32[1]{0}', space=sflag, size = 0x4, scoped, tag = 'scoped memory for tpu_custom_call.1']
    #allocation5 [shape = 'u8[16384]{0}', space=vmem, size = 0x4000, scoped, tag = 'input window, operand 1, single buffered']
    #allocation6 [shape = 's32[1]{0}', space=sflag, size = 0x4, scoped, tag = 'scoped memory for tpu_custom_call.1']
    #allocation7 [shape = 'u8[32768]{0}', space=vmem, size = 0x8000, scoped, tag = 'output window, operand 0, single buffered']
    %7 = vsyncpa [#allocation3], 0
    %8 = vsyncpa [#allocation6], 0
    %9 = vsyncpa [#allocation4], 0
    // Predicated region
    $region2: #{tpu_custom_call.1} parent=1 // pred_check
      _
    $region3: #{tpu_custom_call.1} parent=1 // pred_check_branch
      %11 = sbr.rel (0) target = $region5
    $region4: #{tpu_custom_call.1} parent=1 // pred_region
      %s13 = ssub.s32 512, 512
      %14 = vsyncadd [#allocation3], %s13
      %s16 = sshll.u32 [#allocation2], 4
      %s17 = int_to_ptr.vmem [resolvable:$true] %s16
      %19 = dma.hbm_to_vmem [thread:$0]  %s0, 512, %s17, [#allocation3]
    $region5: #{tpu_custom_call.1} parent=1 // pred_fallthru
      _
    // Predicated region
    $region6: #{tpu_custom_call.1} parent=1 // pred_check
      _
    $region7: #{tpu_custom_call.1} parent=1 // pred_check_branch
      %21 = sbr.rel (0) target = $region9
    $region8: #{tpu_custom_call.1} parent=1 // pred_region
      %s23 = ssub.s32 512, 512
      %24 = vsyncadd [#allocation6], %s23
      %s26 = sshll.u32 [#allocation5], 4
      %s27 = int_to_ptr.vmem [resolvable:$true] %s26
      %29 = dma.hbm_to_vmem [thread:$0]  %s1, 512, %s27, [#allocation6]
    $region9: #{tpu_custom_call.1} parent=1 // pred_fallthru
      _
    // Predicated region
    $region10: #{tpu_custom_call.1} parent=1 // pred_check
      _
    $region11: #{tpu_custom_call.1} parent=1 // pred_check_branch
      %31 = sbr.rel (0) target = $region13
    $region12: #{tpu_custom_call.1} parent=1 // pred_region
      %32 = dma.done [#allocation3], 512
    $region13: #{tpu_custom_call.1} parent=1 // pred_fallthru
      _
    // Predicated region
    $region14: #{tpu_custom_call.1} parent=1 // pred_check
      _
    $region15: #{tpu_custom_call.1} parent=1 // pred_check_branch
      %34 = sbr.rel (0) target = $region17
    $region16: #{tpu_custom_call.1} parent=1 // pred_region
      %35 = dma.done [#allocation6], 512
    $region17: #{tpu_custom_call.1} parent=1 // pred_fallthru
      _
    %v36 = vld [vmem:[#allocation2] sm:$0xff]
    %v37 = vld [vmem:[#allocation2 + $0x8] sm:$0xff]
    %v38 = vld [vmem:[#allocation2 + $0x10] sm:$0xff]
    %v39 = vld [vmem:[#allocation2 + $0x18] sm:$0xff]
    %v40 = vld [vmem:[#allocation5] sm:$0xff]
    %v41 = vld [vmem:[#allocation5 + $0x8] sm:$0xff]
    %v42 = vld [vmem:[#allocation5 + $0x10] sm:$0xff]
    %v43 = vld [vmem:[#allocation5 + $0x18] sm:$0xff]
    %s44 = smul.u32 0, 8
    %v45 = vlaneseq
    %v46 = vshrl.u32 %v45, 7
    %v47 = vstv %s44
    %v48 = vadd.s32 %v47, %v46
    %vm49 = vcmp.ne.f32.partialorder %v40, -1.0
    %vm50 = vcmp.ne.f32.partialorder %v41, -1.0
    %vm51 = vcmp.ne.f32.partialorder %v42, -1.0
    %vm52 = vcmp.ne.f32.partialorder %v43, -1.0
    %vm53 = vcmp.lt.s32.totalorder %v48, 8
    %vm54 = vmand %vm49, %vm53
    %vm55 = vmand %vm50, %vm53
    %vm56 = vmand %vm51, %vm53
    %vm57 = vmand %vm52, %vm53
    %vm58 = vcmp.eq.f32.partialorder %v40, 1.0
    %vm59 = vcmp.eq.f32.partialorder %v41, 1.0
    %vm60 = vcmp.eq.f32.partialorder %v42, 1.0
    %vm61 = vcmp.eq.f32.partialorder %v43, 1.0
    %v62 = vsub.f32 1.0, %v36
    %v63 = vsub.f32 1.0, %v37
    %v64 = vsub.f32 1.0, %v38
    %v65 = vsub.f32 1.0, %v39
    %v66 = vsel %vm58, %v36, %v62
    %v67 = vsel %vm59, %v37, %v63
    %v68 = vsel %vm60, %v38, %v64
    %v69 = vsel %vm61, %v39, %v65
    %v70 = vlog2.pop %v66
    %v71 = vmul.f32 %v70, 0.6931472
    %v72 = vlog2.pop %v67
    %v73 = vmul.f32 %v72, 0.6931472
    %v74 = vlog2.pop %v68
    %v75 = vmul.f32 %v74, 0.6931472
    %v76 = vlog2.pop %v69
    %v77 = vmul.f32 %v76, 0.6931472
    %v78 = vsub.f32 0.0, %v71
    %v79 = vsub.f32 0.0, %v73
    %v80 = vsub.f32 0.0, %v75
    %v81 = vsub.f32 0.0, %v77
    %v82 = vsel %vm54, %v78, 0.0
    %v83 = vsel %vm55, %v79, 0.0
    %v84 = vsel %vm56, %v80, 0.0
    %v85 = vsel %vm57, %v81, 0.0
    %v86 = vsel %vm54, 1, 0
    %v87 = vsel %vm55, 1, 0
    %v88 = vsel %vm56, 1, 0
    %v89 = vsel %vm57, 1, 0
    %v90 = vcvt.s32.f32 %v86
    %v91 = vcvt.s32.f32 %v87
    %v92 = vcvt.s32.f32 %v88
    %v93 = vcvt.s32.f32 %v89
    %v94 = vadd.f32 %v82, 0.0
    %v95 = vadd.f32 %v83, 0.0
    %v96 = vadd.f32 %v84, 0.0
    %v97 = vadd.f32 %v85, 0.0
    %98 = vst [vmem:[#allocation7] sm:$0xff] %v94
    %99 = vst [vmem:[#allocation7 + $0x8] sm:$0xff] %v95
    %100 = vst [vmem:[#allocation7 + $0x10] sm:$0xff] %v96
    %101 = vst [vmem:[#allocation7 + $0x18] sm:$0xff] %v97
    %v102 = vadd.f32 %v90, 0.0
    %v103 = vadd.f32 %v91, 0.0
    %v104 = vadd.f32 %v92, 0.0
    %v105 = vadd.f32 %v93, 0.0
    %106 = vst [vmem:[#allocation7 + $0x20] sm:$0xff] %v102
    %107 = vst [vmem:[#allocation7 + $0x28] sm:$0xff] %v103
    %108 = vst [vmem:[#allocation7 + $0x30] sm:$0xff] %v104
    %109 = vst [vmem:[#allocation7 + $0x38] sm:$0xff] %v105
    // Predicated region
    $region18: #{tpu_custom_call.1} parent=1 // pred_check
      _
    $region19: #{tpu_custom_call.1} parent=1 // pred_check_branch
      %111 = sbr.rel (0) target = $region21
    $region20: #{tpu_custom_call.1} parent=1 // pred_region
      %s113 = ssub.s32 1024, 1024
      %114 = vsyncadd [#allocation4], %s113
      %s116 = sshll.u32 [#allocation7], 4
      %s117 = int_to_ptr.vmem [resolvable:$true] %s116
      %119 = dma.vmem_to_hbm [thread:$0]  %s117, 1024, %s2, [#allocation4]
    $region21: #{tpu_custom_call.1} parent=1 // pred_fallthru
      _
    // Predicated region
    $region22: #{tpu_custom_call.1} parent=1 // pred_check
      _
    $region23: #{tpu_custom_call.1} parent=1 // pred_check_branch
      %121 = sbr.rel (0) target = $region25
    $region24: #{tpu_custom_call.1} parent=1 // pred_region
      %122 = dma.done [#allocation4], 1024
    $region25: #{tpu_custom_call.1} parent=1 // pred_fallthru
      _
    %123 = vsyncpa [#allocation3], 1
    %124 = vsyncpa [#allocation6], 1
    %125 = vsyncpa [#allocation4], 1

</llo_original>
